<compile_context>
chip_gen: v7x
topology: tpu7x:2x2x1
jax: 0.10.0
libtpu: 0.0.40
codegen_flags: <defaults>
</compile_context>

<pallas_src>
import jax
import jax.numpy as jnp
from jax.experimental import pallas as pl
from jax.experimental.pallas import tpu as pltpu


def _round_up(x, m):
    return ((x + m - 1) // m) * m


def critic_kernel(x_ref, w1_ref, b1_ref, w2_ref, b2_ref, w3_ref, b3_ref, out_ref):
    # x_ref: (tb, in_dim) f32 tile (pipelined); w*: bf16 resident; b*: f32 resident.
    cd = w1_ref.dtype  # compute (matmul-input) dtype, bf16
    x = x_ref[...].astype(cd)

    # fc1 + ReLU  (f32 accumulate, f32 bias/ReLU)
    h1 = jnp.dot(x, w1_ref[...], preferred_element_type=jnp.float32) + b1_ref[...]
    h1 = jnp.maximum(h1, 0.0).astype(cd)

    # fc2 + ReLU
    h2 = jnp.dot(h1, w2_ref[...], preferred_element_type=jnp.float32) + b2_ref[...]
    h2 = jnp.maximum(h2, 0.0).astype(cd)

    # fc3 (no activation) -> narrow (tb, action_dim) f32 store
    out_ref[...] = (
        jnp.dot(h2, w3_ref[...], preferred_element_type=jnp.float32) + b3_ref[...]
    ).astype(out_ref.dtype)


def prepare_params(params, compute_dtype=jnp.bfloat16):
    """One-time cast/reshape of the Critic parameters for the kernel.

    Do this once and cache the result alongside the params (avoids per-call
    XLA cast kernels / HBM round-trips in an RL inner loop).
    """
    w1, b1, w2, b2, w3, b3 = params
    return (
        w1.astype(compute_dtype),
        jnp.asarray(b1).reshape(1, -1).astype(jnp.float32),
        w2.astype(compute_dtype),
        jnp.asarray(b2).reshape(1, -1).astype(jnp.float32),
        w3.astype(compute_dtype),
        jnp.asarray(b3).reshape(1, -1).astype(jnp.float32),
    )


def critic_forward(x, prepared_params, *, tile_b=4096):
    """x: (..., input_dim) float32. Returns (..., action_dim) float32."""
    w1, b1, w2, b2, w3, b3 = prepared_params
    in_dim, hidden = w1.shape
    action_dim = w3.shape[1]

    lead_shape = x.shape[:-1]
    x2 = x.reshape(-1, in_dim)
    batch = x2.shape[0]

    if batch == 0:  # empty leading dims: nothing to do
        return jnp.zeros((*lead_shape, action_dim), jnp.float32)

    # Batch tile: multiple of 8 sublanes, capped at tile_b; no batch padding —
    # the ragged final block is masked by Pallas. If one tile would cover the
    # whole batch, split into 2 so the parallel axis can use both v7x cores.
    tb = min(tile_b, _round_up(batch, 8))
    if pl.cdiv(batch, tb) == 1 and batch > 8:
        tb = _round_up(pl.cdiv(batch, 2), 8)
    grid = (pl.cdiv(batch, tb),)

    out = pl.pallas_call(
        critic_kernel,
        out_shape=jax.ShapeDtypeStruct((batch, action_dim), jnp.float32),
        grid=grid,
        in_specs=[
            pl.BlockSpec((tb, in_dim), lambda i: (i, 0)),        # x tile (pipelined)
            pl.BlockSpec((in_dim, hidden), lambda i: (0, 0)),    # w1 (resident)
            pl.BlockSpec((1, hidden), lambda i: (0, 0)),         # b1 (resident)
            pl.BlockSpec((hidden, hidden), lambda i: (0, 0)),    # w2 (resident)
            pl.BlockSpec((1, hidden), lambda i: (0, 0)),         # b2 (resident)
            pl.BlockSpec((hidden, action_dim), lambda i: (0, 0)),  # w3 (resident)
            pl.BlockSpec((1, action_dim), lambda i: (0, 0)),     # b3 (resident)
        ],
        out_specs=pl.BlockSpec((tb, action_dim), lambda i: (i, 0)),
        compiler_params=pltpu.CompilerParams(
            dimension_semantics=("parallel",),
        ),
    )(x2, w1, b1, w2, b2, w3, b3)

    return out.reshape(*lead_shape, action_dim)


def init_params(key, input_dim, hidden, action_dim):
    """Deterministic init mimicking PyTorch nn.Linear default U[-1/sqrt(fan_in), 1/sqrt(fan_in)]."""
    ks = jax.random.split(key, 6)

    def linear(kw, kb, fan_in, fan_out):
        bound = 1.0 / jnp.sqrt(jnp.float32(fan_in))
        w = jax.random.uniform(kw, (fan_in, fan_out), jnp.float32, -bound, bound)
        b = jax.random.uniform(kb, (1, fan_out), jnp.float32, -bound, bound)
        return w, b

    w1, b1 = linear(ks[0], ks[1], input_dim, hidden)
    w2, b2 = linear(ks[2], ks[3], hidden, hidden)
    w3, b3 = linear(ks[4], ks[5], hidden, action_dim)
    return (w1, b1, w2, b2, w3, b3)


def reference_forward(x, params, compute_dtype=jnp.bfloat16):
    """Pure-JAX reference with identical math (bf16 matmul inputs, f32 accumulate)."""
    w1, b1, w2, b2, w3, b3 = params
    h1 = jnp.maximum(
        jnp.dot(x.astype(compute_dtype), w1.astype(compute_dtype),
                preferred_element_type=jnp.float32) + b1, 0.0)
    h2 = jnp.maximum(
        jnp.dot(h1.astype(compute_dtype), w2.astype(compute_dtype),
                preferred_element_type=jnp.float32) + b2, 0.0)
    return jnp.dot(h2.astype(compute_dtype), w3.astype(compute_dtype),
                   preferred_element_type=jnp.float32) + b3


if __name__ == "__main__":
    # Small COMA-like config.
    agent_num = 3
    state_dim = 5
    action_dim = 4
    hidden = 64
    input_dim = 1 + state_dim * agent_num + agent_num  # 19

    key = jax.random.PRNGKey(0)
    k_x, k_p = jax.random.split(key)

    # Leading dims (episodes, agents) are flattened into batch inside the wrapper.
    x = jax.random.normal(k_x, (2, 4, input_dim), dtype=jnp.float32)
    params = init_params(k_p, input_dim, hidden, action_dim)
    prepared = prepare_params(params)   # cast once, reuse across calls

    out = critic_forward(x, prepared)
    out = jax.block_until_ready(out)

    ref = reference_forward(x, params)
    assert out.shape == (2, 4, action_dim)
    assert jnp.allclose(out, ref, atol=1e-4, rtol=1e-4), "mismatch vs JAX reference"

    print("KERNEL_OK")
</pallas_src>

<mosaic_0001>
module attributes {stable_mosaic.version = 11 : i64} {
  func.func @critic_kernel(%arg0: i32, %arg1: memref<8x19xf32, #tpu.memory_space<vmem>>, %arg2: memref<19x64xbf16, #tpu.memory_space<vmem>>, %arg3: memref<1x64xf32, #tpu.memory_space<vmem>>, %arg4: memref<64x64xbf16, #tpu.memory_space<vmem>>, %arg5: memref<1x64xf32, #tpu.memory_space<vmem>>, %arg6: memref<64x4xbf16, #tpu.memory_space<vmem>>, %arg7: memref<1x4xf32, #tpu.memory_space<vmem>>, %arg8: memref<8x4xf32, #tpu.memory_space<vmem>>) attributes {dimension_semantics = [#tpu.dimension_semantics<parallel>], iteration_bounds = array<i64: 1>, scalar_prefetch = 0 : i64, scratch_operands = 0 : i64, tpu.core_type = #tpu.core_type<tc>, window_params = [{transform_indices = @transform_0, window_bounds = array<i64: 8, 19>}, {pipeline_mode = #tpu.pipeline_mode<synchronous>, transform_indices = @transform_1, window_bounds = array<i64: 19, 64>}, {pipeline_mode = #tpu.pipeline_mode<synchronous>, transform_indices = @transform_2, window_bounds = array<i64: 1, 64>}, {pipeline_mode = #tpu.pipeline_mode<synchronous>, transform_indices = @transform_3, window_bounds = array<i64: 64, 64>}, {pipeline_mode = #tpu.pipeline_mode<synchronous>, transform_indices = @transform_4, window_bounds = array<i64: 1, 64>}, {pipeline_mode = #tpu.pipeline_mode<synchronous>, transform_indices = @transform_5, window_bounds = array<i64: 64, 4>}, {pipeline_mode = #tpu.pipeline_mode<synchronous>, transform_indices = @transform_6, window_bounds = array<i64: 1, 4>}, {transform_indices = @transform_7, window_bounds = array<i64: 8, 4>}]} {
    %c0 = arith.constant 0 : index
    %c0_0 = arith.constant 0 : index
    %0 = vector.load %arg1[%c0, %c0_0] : memref<8x19xf32, #tpu.memory_space<vmem>>, vector<8x19xf32>
    %1 = arith.truncf %0 : vector<8x19xf32> to vector<8x19xbf16>
    %c0_1 = arith.constant 0 : index
    %c0_2 = arith.constant 0 : index
    %2 = vector.load %arg2[%c0_1, %c0_2] : memref<19x64xbf16, #tpu.memory_space<vmem>>, vector<19x64xbf16>
    %cst = arith.constant dense<0.000000e+00> : vector<8x64xf32>
    %3 = tpu.matmul %1, %2, %cst {dimension_numbers = #tpu.dot_dimension_numbers<[1], [0], [0], [1], [0, 0, 1, 1], [], []>} : vector<8x19xbf16>, vector<19x64xbf16>, vector<8x64xf32> -> vector<8x64xf32>
    %c0_3 = arith.constant 0 : index
    %c0_4 = arith.constant 0 : index
    %4 = vector.load %arg3[%c0_3, %c0_4] : memref<1x64xf32, #tpu.memory_space<vmem>>, vector<1x64xf32>
    %5 = vector.broadcast %4 : vector<1x64xf32> to vector<8x64xf32>
    %6 = arith.addf %3, %5 : vector<8x64xf32>
    %cst_5 = arith.constant 0.000000e+00 : f32
    %7 = vector.broadcast %cst_5 : f32 to vector<8x64xf32>
    %8 = arith.maximumf %6, %7 : vector<8x64xf32>
    %9 = arith.truncf %8 : vector<8x64xf32> to vector<8x64xbf16>
    %c0_6 = arith.constant 0 : index
    %c0_7 = arith.constant 0 : index
    %10 = vector.load %arg4[%c0_6, %c0_7] : memref<64x64xbf16, #tpu.memory_space<vmem>>, vector<64x64xbf16>
    %cst_8 = arith.constant dense<0.000000e+00> : vector<8x64xf32>
    %11 = tpu.matmul %9, %10, %cst_8 {dimension_numbers = #tpu.dot_dimension_numbers<[1], [0], [0], [1], [0, 0, 1, 1], [], []>} : vector<8x64xbf16>, vector<64x64xbf16>, vector<8x64xf32> -> vector<8x64xf32>
    %c0_9 = arith.constant 0 : index
    %c0_10 = arith.constant 0 : index
    %12 = vector.load %arg5[%c0_9, %c0_10] : memref<1x64xf32, #tpu.memory_space<vmem>>, vector<1x64xf32>
    %13 = vector.broadcast %12 : vector<1x64xf32> to vector<8x64xf32>
    %14 = arith.addf %11, %13 : vector<8x64xf32>
    %cst_11 = arith.constant 0.000000e+00 : f32
    %15 = vector.broadcast %cst_11 : f32 to vector<8x64xf32>
    %16 = arith.maximumf %14, %15 : vector<8x64xf32>
    %17 = arith.truncf %16 : vector<8x64xf32> to vector<8x64xbf16>
    %c0_12 = arith.constant 0 : index
    %c0_13 = arith.constant 0 : index
    %18 = vector.load %arg6[%c0_12, %c0_13] : memref<64x4xbf16, #tpu.memory_space<vmem>>, vector<64x4xbf16>
    %cst_14 = arith.constant dense<0.000000e+00> : vector<8x4xf32>
    %19 = tpu.matmul %17, %18, %cst_14 {dimension_numbers = #tpu.dot_dimension_numbers<[1], [0], [0], [1], [0, 0, 1, 1], [], []>} : vector<8x64xbf16>, vector<64x4xbf16>, vector<8x4xf32> -> vector<8x4xf32>
    %c0_15 = arith.constant 0 : index
    %c0_16 = arith.constant 0 : index
    %20 = vector.load %arg7[%c0_15, %c0_16] : memref<1x4xf32, #tpu.memory_space<vmem>>, vector<1x4xf32>
    %21 = vector.broadcast %20 : vector<1x4xf32> to vector<8x4xf32>
    %22 = arith.addf %19, %21 : vector<8x4xf32>
    %c0_17 = arith.constant 0 : index
    %c0_18 = arith.constant 0 : index
    %23 = vector.load %arg8[%c0_17, %c0_18] : memref<8x4xf32, #tpu.memory_space<vmem>>, vector<8x4xf32>
    tpu.vector_store %arg8[%c0_17, %c0_18], %22 {strides = array<i32>} : memref<8x4xf32, #tpu.memory_space<vmem>>, vector<8x4xf32>,
    return
  }
  func.func @transform_0(%arg0: i32) -> (i32, i32) {
    %c0_i32 = arith.constant 0 : i32
    %c0_i32_0 = arith.constant 0 : i32
    return %arg0, %c0_i32 : i32, i32
  }
  func.func @transform_1(%arg0: i32) -> (i32, i32) {
    %c0_i32 = arith.constant 0 : i32
    %c0_i32_0 = arith.constant 0 : i32
    %c0_i32_1 = arith.constant 0 : i32
    return %c0_i32, %c0_i32_0 : i32, i32
  }
  func.func @transform_2(%arg0: i32) -> (i32, i32) {
    %c0_i32 = arith.constant 0 : i32
    %c0_i32_0 = arith.constant 0 : i32
    %c0_i32_1 = arith.constant 0 : i32
    return %c0_i32, %c0_i32_0 : i32, i32
  }
  func.func @transform_3(%arg0: i32) -> (i32, i32) {
    %c0_i32 = arith.constant 0 : i32
    %c0_i32_0 = arith.constant 0 : i32
    %c0_i32_1 = arith.constant 0 : i32
    return %c0_i32, %c0_i32_0 : i32, i32
  }
  func.func @transform_4(%arg0: i32) -> (i32, i32) {
    %c0_i32 = arith.constant 0 : i32
    %c0_i32_0 = arith.constant 0 : i32
    %c0_i32_1 = arith.constant 0 : i32
    return %c0_i32, %c0_i32_0 : i32, i32
  }
  func.func @transform_5(%arg0: i32) -> (i32, i32) {
    %c0_i32 = arith.constant 0 : i32
    %c0_i32_0 = arith.constant 0 : i32
    %c0_i32_1 = arith.constant 0 : i32
    return %c0_i32, %c0_i32_0 : i32, i32
  }
  func.func @transform_6(%arg0: i32) -> (i32, i32) {
    %c0_i32 = arith.constant 0 : i32
    %c0_i32_0 = arith.constant 0 : i32
    %c0_i32_1 = arith.constant 0 : i32
    return %c0_i32, %c0_i32_0 : i32, i32
  }
  func.func @transform_7(%arg0: i32) -> (i32, i32) {
    %c0_i32 = arith.constant 0 : i32
    %c0_i32_0 = arith.constant 0 : i32
    return %arg0, %c0_i32 : i32, i32
  }
}

</mosaic_0001>

<llo_original>
// kernel: tpu_custom_call.1
$region0: #{tpu_custom_call.1}
  #allocation0 [shape = 'u32[]', space=smem, size = 0x4, offset = 0x4, fixed_abs, tag = 'smem constant byte address 0x4 - core index']
  #allocation1 [shape = 'u32[144,128]{1,0:T(1,128)}', space=vmem, size = 0x12000, scoped, tag = 'internal scratch']
  %s0 = inlined_call_operand.hbm [shape: f32[8,19], index: 0, kind: input, shape index: {}]
  %s1 = inlined_call_operand.vmem [shape: bf16[19,64], index: 1, kind: input, shape index: {}]
  %s2 = inlined_call_operand.vmem [shape: f32[1,64], index: 2, kind: input, shape index: {}]
  %s3 = inlined_call_operand.vmem [shape: bf16[64,64], index: 3, kind: input, shape index: {}]
  %s4 = inlined_call_operand.vmem [shape: f32[1,64], index: 4, kind: input, shape index: {}]
  %s5 = inlined_call_operand.vmem [shape: bf16[64,4], index: 5, kind: input, shape index: {}]
  %s6 = inlined_call_operand.vmem [shape: f32[1,4], index: 6, kind: input, shape index: {}]
  %s7 = inlined_call_operand.vmem [shape: f32[8,4], index: 7, kind: output, shape index: {}]
  %s8 = sld [smem:[#allocation0]]
  $region42: #{tpu_custom_call.1} parent=0
    _
  %s10 = ssub.s32 1, %s8
  %s11 = scalar_select 0, %s10, %s8
  $region1: #{tpu_custom_call.1} parent=0
    #allocation2 [shape = 'u8[4096]{0}', space=vmem, size = 0x1000, scoped, tag = 'input window, operand 0, single buffered']
    #allocation3 [shape = 's32[1]{0}', space=sflag, size = 0x4, scoped, tag = 'scoped memory for tpu_custom_call.1']
    %12 = vsyncpa [#allocation3], 0
    // Predicated region
    $region2: #{tpu_custom_call.1} parent=1 // pred_check
      _
    $region3: #{tpu_custom_call.1} parent=1 // pred_check_branch
      %14 = sbr.rel (0) target = $region5
    $region4: #{tpu_custom_call.1} parent=1 // pred_region
      %s16 = ssub.s32 128, 128
      %17 = vsyncadd [#allocation3], %s16
      %s19 = sshll.u32 [#allocation2], 4
      %s20 = int_to_ptr.vmem [resolvable:$true] %s19
      %22 = dma.hbm_to_vmem [thread:$0]  %s0, 128, %s20, [#allocation3]
    $region5: #{tpu_custom_call.1} parent=1 // pred_fallthru
      _
    // Predicated region
    $region6: #{tpu_custom_call.1} parent=1 // pred_check
      _
    $region7: #{tpu_custom_call.1} parent=1 // pred_check_branch
      %24 = sbr.rel (0) target = $region9
    $region8: #{tpu_custom_call.1} parent=1 // pred_region
      _
    $region9: #{tpu_custom_call.1} parent=1 // pred_fallthru
      _
    // Predicated region
    $region10: #{tpu_custom_call.1} parent=1 // pred_check
      _
    $region11: #{tpu_custom_call.1} parent=1 // pred_check_branch
      %26 = sbr.rel (0) target = $region13
    $region12: #{tpu_custom_call.1} parent=1 // pred_region
      _
    $region13: #{tpu_custom_call.1} parent=1 // pred_fallthru
      _
    // Predicated region
    $region14: #{tpu_custom_call.1} parent=1 // pred_check
      _
    $region15: #{tpu_custom_call.1} parent=1 // pred_check_branch
      %28 = sbr.rel (0) target = $region17
    $region16: #{tpu_custom_call.1} parent=1 // pred_region
      _
    $region17: #{tpu_custom_call.1} parent=1 // pred_fallthru
      _
    // Predicated region
    $region18: #{tpu_custom_call.1} parent=1 // pred_check
      _
    $region19: #{tpu_custom_call.1} parent=1 // pred_check_branch
      %30 = sbr.rel (0) target = $region21
    $region20: #{tpu_custom_call.1} parent=1 // pred_region
      _
    $region21: #{tpu_custom_call.1} parent=1 // pred_fallthru
      _
    // Predicated region
    $region22: #{tpu_custom_call.1} parent=1 // pred_check
      _
    $region23: #{tpu_custom_call.1} parent=1 // pred_check_branch
      %32 = sbr.rel (0) target = $region25
    $region24: #{tpu_custom_call.1} parent=1 // pred_region
      _
    $region25: #{tpu_custom_call.1} parent=1 // pred_fallthru
      _
    // Predicated region
    $region26: #{tpu_custom_call.1} parent=1 // pred_check
      _
    $region27: #{tpu_custom_call.1} parent=1 // pred_check_branch
      %34 = sbr.rel (0) target = $region29
    $region28: #{tpu_custom_call.1} parent=1 // pred_region
      _
    $region29: #{tpu_custom_call.1} parent=1 // pred_fallthru
      _
    // Predicated region
    $region30: #{tpu_custom_call.1} parent=1 // pred_check
      _
    $region31: #{tpu_custom_call.1} parent=1 // pred_check_branch
      %36 = sbr.rel (0) target = $region33
    $region32: #{tpu_custom_call.1} parent=1 // pred_region
      %37 = dma.done [#allocation3], 128
    $region33: #{tpu_custom_call.1} parent=1 // pred_fallthru
      _
    %v39 = vld [vmem:[#allocation2] sm:$0xff]
    %v40 = vpack.c.bf16 %v39, %v39
    %v41 = vld [vmem:[%s1] sm:$0xf]
    %v42 = vld [vmem:[%s1 + $0x4] sm:$0xf]
    %v43 = vld [vmem:[%s1 + $0x8] sm:$0x3]
    %v44 = vld [vmem:[%s2] sm:$0x1]
    %v46 = vlaneseq
    %v47 = vshrl.u32 %v46, 7
    %v48 = vsub.s32 0, %v47
    %v49 = vrot.slane %v44, %v48
    %v54 = vunpack.c.l.b16 %v41
    %v55 = vunpack.c.l.b16 %v42
    %v56 = vunpack.c.l.b16 %v43
    %v57 = vpack.c.b16 %v55, %v54
    %v58 = vpack.c.b16 %v56, %v56
    %vm60 = vcmask 154624
    %v62 = vsel %vm60, %v40, 0
    %vm64 = vcmask 1040384
    %vm65 = vcmask 1041408
    %v66 = vsel %vm64, 4294967295, 65535
    %v67 = vsel %vm65, %v66, 0
    %v69 = vand.u32 %v58, %v67
    %71 = vmatprep.subr.bf16.mxu0 0
    %72 = vmatpush1.bf16.msra.mxu0 %v57
    %73 = vmatprep.subr.bf16.mxu0 0
    %74 = vmatpush1.bf16.msra.mxu0 %v69
    %75 = vmatprep.subr.bf16.mxu0 0
    %76 = vmatpush1.bf16.msra.mxu0 0
    %77 = vmatprep.subr.bf16.mxu0 0
    %78 = vmatpush1.bf16.msra.mxu0 0
    %79 = vmatprep.subr.bf16.mxu0 0
    %80 = vmatpush1.bf16.msra.mxu0 0
    %81 = vmatprep.subr.bf16.mxu0 0
    %82 = vmatpush1.bf16.msra.mxu0 0
    %83 = vmatprep.subr.bf16.mxu0 0
    %84 = vmatpush1.bf16.msra.mxu0 0
    %85 = vmatprep.subr.bf16.mxu0 0
    %86 = vmatpush1.bf16.msra.mxu0 0
    %87 = vmatprep.subr.bf16.mxu0 0
    %88 = vmatpush1.bf16.msra.mxu0 0
    %89 = vmatprep.subr.bf16.mxu0 0
    %90 = vmatpush1.bf16.msra.mxu0 0
    %91 = vmatprep.subr.bf16.mxu0 0
    %92 = vmatpush1.bf16.msra.mxu0 0
    %93 = vmatprep.subr.bf16.mxu0 0
    %94 = vmatpush1.bf16.msra.mxu0 0
    %95 = vmatprep.subr.bf16.mxu0 0
    %96 = vmatpush1.bf16.msra.mxu0 0
    %97 = vmatprep.subr.bf16.mxu0 0
    %98 = vmatpush1.bf16.msra.mxu0 0
    %99 = vmatprep.subr.bf16.mxu0 0
    %100 = vmatpush1.bf16.msra.mxu0 0
    %101 = vmatprep.subr.bf16.mxu0 0
    %102 = vmatpush1.bf16.msra.mxu0 0
    %103 = vmatprep.mubr.bf16.mxu0 0
    %104 = vmatmul.mubr.bf16.gmra.mrb[0].mxu0 %v62
    %v105 = vpop.f32.mrb[0].mxu0
    %v106 = vadd.f32 %v49, %v105
    %v107 = vpop.f32.mrb[0].mxu0
    %v108 = vpop.f32.mrb[0].mxu0
    %v109 = vpop.f32.mrb[0].mxu0
    %110 = vdwg.mxu0
    %v111 = vmax.f32 %v106, 0.0
    %v112 = vpack.c.bf16 %v111, %v111
    %v113 = vld [vmem:[%s3] sm:$0xf]
    %v114 = vld [vmem:[%s3 + $0x4] sm:$0xf]
    %v115 = vld [vmem:[%s3 + $0x8] sm:$0xf]
    %v116 = vld [vmem:[%s3 + $0xc] sm:$0xf]
    %v117 = vld [vmem:[%s3 + $0x10] sm:$0xf]
    %v118 = vld [vmem:[%s3 + $0x14] sm:$0xf]
    %v119 = vld [vmem:[%s3 + $0x18] sm:$0xf]
    %v120 = vld [vmem:[%s3 + $0x1c] sm:$0xf]
    %v121 = vld [vmem:[%s4] sm:$0x1]
    %v123 = vlaneseq
    %v124 = vshrl.u32 %v123, 7
    %v125 = vsub.s32 0, %v124
    %v126 = vrot.slane %v121, %v125
    %v136 = vunpack.c.l.b16 %v113
    %v137 = vunpack.c.l.b16 %v114
    %v138 = vunpack.c.l.b16 %v115
    %v139 = vunpack.c.l.b16 %v116
    %v140 = vunpack.c.l.b16 %v117
    %v141 = vunpack.c.l.b16 %v118
    %v142 = vunpack.c.l.b16 %v119
    %v143 = vunpack.c.l.b16 %v120
    %v144 = vpack.c.b16 %v137, %v136
    %v145 = vpack.c.b16 %v139, %v138
    %v146 = vpack.c.b16 %v141, %v140
    %v147 = vpack.c.b16 %v143, %v142
    %vm152 = vcmask 523264
    %v154 = vsel %vm152, %v112, 0
    %156 = vmatprep.subr.bf16.mxu0 0
    %157 = vmatpush1.bf16.msra.mxu0 %v144
    %158 = vmatprep.subr.bf16.mxu0 0
    %159 = vmatpush1.bf16.msra.mxu0 %v145
    %160 = vmatprep.subr.bf16.mxu0 0
    %161 = vmatpush1.bf16.msra.mxu0 %v146
    %162 = vmatprep.subr.bf16.mxu0 0
    %163 = vmatpush1.bf16.msra.mxu0 %v147
    %164 = vmatprep.subr.bf16.mxu0 0
    %165 = vmatpush1.bf16.msra.mxu0 0
    %166 = vmatprep.subr.bf16.mxu0 0
    %167 = vmatpush1.bf16.msra.mxu0 0
    %168 = vmatprep.subr.bf16.mxu0 0
    %169 = vmatpush1.bf16.msra.mxu0 0
    %170 = vmatprep.subr.bf16.mxu0 0
    %171 = vmatpush1.bf16.msra.mxu0 0
    %172 = vmatprep.subr.bf16.mxu0 0
    %173 = vmatpush1.bf16.msra.mxu0 0
    %174 = vmatprep.subr.bf16.mxu0 0
    %175 = vmatpush1.bf16.msra.mxu0 0
    %176 = vmatprep.subr.bf16.mxu0 0
    %177 = vmatpush1.bf16.msra.mxu0 0
    %178 = vmatprep.subr.bf16.mxu0 0
    %179 = vmatpush1.bf16.msra.mxu0 0
    %180 = vmatprep.subr.bf16.mxu0 0
    %181 = vmatpush1.bf16.msra.mxu0 0
    %182 = vmatprep.subr.bf16.mxu0 0
    %183 = vmatpush1.bf16.msra.mxu0 0
    %184 = vmatprep.subr.bf16.mxu0 0
    %185 = vmatpush1.bf16.msra.mxu0 0
    %186 = vmatprep.subr.bf16.mxu0 0
    %187 = vmatpush1.bf16.msra.mxu0 0
    %188 = vmatprep.mubr.bf16.mxu0 0
    %189 = vmatmul.mubr.bf16.gmra.mrb[0].mxu0 %v154
    %v190 = vpop.f32.mrb[0].mxu0
    %v191 = vadd.f32 %v126, %v190
    %v192 = vpop.f32.mrb[0].mxu0
    %v193 = vpop.f32.mrb[0].mxu0
    %v194 = vpop.f32.mrb[0].mxu0
    %195 = vdwg.mxu0
    %v196 = vmax.f32 %v191, 0.0
    %v197 = vpack.c.bf16 %v196, %v196
    %v198 = vld [vmem:[%s5] sm:$0xf]
    %v199 = vld [vmem:[%s5 + $0x4] sm:$0xf]
    %v200 = vld [vmem:[%s5 + $0x8] sm:$0xf]
    %v201 = vld [vmem:[%s5 + $0xc] sm:$0xf]
    %v202 = vld [vmem:[%s5 + $0x10] sm:$0xf]
    %v203 = vld [vmem:[%s5 + $0x14] sm:$0xf]
    %v204 = vld [vmem:[%s5 + $0x18] sm:$0xf]
    %v205 = vld [vmem:[%s5 + $0x1c] sm:$0xf]
    %v206 = vld [vmem:[%s6] sm:$0x1]
    %v208 = vlaneseq
    %v209 = vshrl.u32 %v208, 7
    %v210 = vsub.s32 0, %v209
    %v211 = vrot.slane %v206, %v210
    %v221 = vunpack.c.l.b16 %v198
    %v222 = vunpack.c.l.b16 %v199
    %v223 = vunpack.c.l.b16 %v200
    %v224 = vunpack.c.l.b16 %v201
    %v225 = vunpack.c.l.b16 %v202
    %v226 = vunpack.c.l.b16 %v203
    %v227 = vunpack.c.l.b16 %v204
    %v228 = vunpack.c.l.b16 %v205
    %v229 = vpack.c.b16 %v222, %v221
    %v230 = vpack.c.b16 %v224, %v223
    %v231 = vpack.c.b16 %v226, %v225
    %v232 = vpack.c.b16 %v228, %v227
    %v238 = vsel %vm152, %v197, 0
    %240 = vmatprep.subr.bf16.mxu0 0
    %241 = vmatpush1.bf16.msra.mxu0 %v229
    %242 = vmatprep.subr.bf16.mxu0 0
    %243 = vmatpush1.bf16.msra.mxu0 %v230
    %244 = vmatprep.subr.bf16.mxu0 0
    %245 = vmatpush1.bf16.msra.mxu0 %v231
    %246 = vmatprep.subr.bf16.mxu0 0
    %247 = vmatpush1.bf16.msra.mxu0 %v232
    %248 = vmatprep.subr.bf16.mxu0 0
    %249 = vmatpush1.bf16.msra.mxu0 0
    %250 = vmatprep.subr.bf16.mxu0 0
    %251 = vmatpush1.bf16.msra.mxu0 0
    %252 = vmatprep.subr.bf16.mxu0 0
    %253 = vmatpush1.bf16.msra.mxu0 0
    %254 = vmatprep.subr.bf16.mxu0 0
    %255 = vmatpush1.bf16.msra.mxu0 0
    %256 = vmatprep.subr.bf16.mxu0 0
    %257 = vmatpush1.bf16.msra.mxu0 0
    %258 = vmatprep.subr.bf16.mxu0 0
    %259 = vmatpush1.bf16.msra.mxu0 0
    %260 = vmatprep.subr.bf16.mxu0 0
    %261 = vmatpush1.bf16.msra.mxu0 0
    %262 = vmatprep.subr.bf16.mxu0 0
    %263 = vmatpush1.bf16.msra.mxu0 0
    %264 = vmatprep.subr.bf16.mxu0 0
    %265 = vmatpush1.bf16.msra.mxu0 0
    %266 = vmatprep.subr.bf16.mxu0 0
    %267 = vmatpush1.bf16.msra.mxu0 0
    %268 = vmatprep.subr.bf16.mxu0 0
    %269 = vmatpush1.bf16.msra.mxu0 0
    %270 = vmatprep.subr.bf16.mxu0 0
    %271 = vmatpush1.bf16.msra.mxu0 0
    %272 = vmatprep.mubr.bf16.mxu0 0
    %273 = vmatmul.mubr.bf16.gmra.mrb[0].mxu0 %v238
    %v274 = vpop.f32.mrb[0].mxu0
    %v275 = vadd.f32 %v211, %v274
    %v276 = vpop.f32.mrb[0].mxu0
    %v277 = vpop.f32.mrb[0].mxu0
    %v278 = vpop.f32.mrb[0].mxu0
    %279 = vdwg.mxu0
    %vm280 = vcmask 31744
    %281 = vst.msk [vmem:[%s7] sm:$0xff] %vm280, %v275
    // Predicated region
    $region34: #{tpu_custom_call.1} parent=1 // pred_check
      _
    $region35: #{tpu_custom_call.1} parent=1 // pred_check_branch
      %283 = sbr.rel (0) target = $region37
    $region36: #{tpu_custom_call.1} parent=1 // pred_region
      _
    $region37: #{tpu_custom_call.1} parent=1 // pred_fallthru
      _
    // Predicated region
    $region38: #{tpu_custom_call.1} parent=1 // pred_check
      _
    $region39: #{tpu_custom_call.1} parent=1 // pred_check_branch
      %285 = sbr.rel (0) target = $region41
    $region40: #{tpu_custom_call.1} parent=1 // pred_region
      _
    $region41: #{tpu_custom_call.1} parent=1 // pred_fallthru
      _
    %286 = vsyncpa [#allocation3], 1

</llo_original>
